<compile_context>
chip_gen: v7x
topology: tpu7x:2x2x1
jax: 0.10.0
libtpu: 0.0.40
codegen_flags: <defaults>
</compile_context>

<pallas_src>
import math

import jax
import jax.numpy as jnp
from jax.experimental import pallas as pl
from jax.experimental.pallas import tpu as pltpu

# ---------------- problem sizes (small, consistent with the module) ----------------
B = 2                  # n_clouds (batch)
S = 8                  # seq_len (points per cloud)
DIN = 3                # input_dim (xyz points)
DOUT = 32              # output_dim
FEAT = DOUT - DIN      # feature_dim  (concatenate_input=True) -> 29
INNER = FEAT           # inner_dim                              -> 29
N = B * S              # rows processed per kernel invocation
ROWS = DIN + 1 + DOUT + 1   # consolidated weight-slab rows -> 37


def _gelu_exact(t):
    # torch.nn.GELU default (erf-based, exact)
    return 0.5 * t * (1.0 + jax.lax.erf(t * jnp.float32(1.0 / math.sqrt(2.0))))


def embedding_kernel(x_ref, w_ref, o_ref):
    x = x_ref[...]                                    # (N, DIN) f32

    # ---- unpack the single consolidated weight slab (static slices: free) ----
    w1e = w_ref[:DIN, :]                              # (DIN, DOUT)   [W1 | I_DIN]
    b1e = w_ref[DIN:DIN + 1, :]                       # (1, DOUT)     [b1 | 0]
    w2e = w_ref[DIN + 1:DIN + 1 + DOUT, :]            # (DOUT, DOUT)  [[W2|0];[0|I_DIN]]
    b2e = w_ref[DIN + 1 + DOUT:, :]                   # (1, DOUT)     [b2 | 0]

    # ---- stage 1: linear1 + input passthrough in one MXU dot ----
    # lanes [0, INNER)  = x @ W1 + b1
    # lanes [INNER, 32) = x (identity columns, zero bias)
    t = jnp.dot(x, w1e, preferred_element_type=jnp.float32) + b1e      # (N, DOUT)

    # GELU only on the feature lanes; pass-through lanes must stay exactly x.
    lane = jax.lax.broadcasted_iota(jnp.int32, t.shape, dimension=1)
    h = jnp.where(lane < INNER, _gelu_exact(t), t)                     # (N, DOUT)

    # ---- stage 2: linear2 + passthrough in one MXU dot ----
    out = jnp.dot(h, w2e, preferred_element_type=jnp.float32) + b2e    # (N, DOUT)
    o_ref[...] = out.astype(o_ref.dtype)              # == concat([linear2(gelu(linear1(x))), x], -1)


def embedding_forward(x, w_slab):
    """x: (B, S, DIN) float32. w_slab: (ROWS, DOUT) consolidated weights."""
    b, s, din = x.shape
    assert din == DIN, f"expected input_dim={DIN}, got {din}"
    assert w_slab.shape == (ROWS, DOUT), f"expected weight slab ({ROWS},{DOUT}), got {w_slab.shape}"
    n = b * s
    x2 = x.reshape(n, din)                            # contiguous, no data movement

    out2 = pl.pallas_call(
        embedding_kernel,
        out_shape=jax.ShapeDtypeStruct((n, DOUT), jnp.float32),
        # No grid / no pipeline: whole operands resident in VMEM for the single step.
        in_specs=[
            pl.BlockSpec(memory_space=pltpu.MemorySpace.VMEM),
            pl.BlockSpec(memory_space=pltpu.MemorySpace.VMEM),
        ],
        out_specs=pl.BlockSpec(memory_space=pltpu.MemorySpace.VMEM),
        cost_estimate=pl.CostEstimate(
            flops=2 * n * DOUT * (DIN + DOUT) + 2 * n * DOUT,
            transcendentals=n * INNER,
            bytes_accessed=4 * (n * DIN + ROWS * DOUT + n * DOUT),
        ),
    )(x2, w_slab)
    return out2.reshape(b, s, DOUT)


# ---------------- parameters ----------------
def make_params(key):
    """Raw nn.Linear-style params (weights stored (in, out) so the kernel does x @ W + b)."""
    ks = jax.random.split(key, 2)

    def lin(k, fan_in, fan_out):
        bound = 1.0 / math.sqrt(fan_in)
        kw, kb = jax.random.split(k)
        w = jax.random.uniform(kw, (fan_in, fan_out), jnp.float32, -bound, bound)
        b = jax.random.uniform(kb, (fan_out,), jnp.float32, -bound, bound)
        return w, b

    w1, b1 = lin(ks[0], DIN, INNER)
    w2, b2 = lin(ks[1], INNER, FEAT)
    return w1, b1, w2, b2


def pack_params(w1, b1, w2, b2):
    """One-time host-side packing into ONE consolidated (ROWS, DOUT) VMEM slab."""
    eye_din = jnp.eye(DIN, dtype=jnp.float32)
    # stage 1: [W1 | I_DIN] and [b1 | 0]
    w1_ext = jnp.concatenate([w1, eye_din], axis=1)                               # (DIN, DOUT)
    b1_ext = jnp.concatenate([b1, jnp.zeros((DIN,), jnp.float32)])[None, :]       # (1, DOUT)
    # stage 2: [[W2 | 0]; [0 | I_DIN]] and [b2 | 0]
    top = jnp.concatenate([w2, jnp.zeros((INNER, DIN), jnp.float32)], axis=1)     # (INNER, DOUT)
    bot = jnp.concatenate([jnp.zeros((DIN, FEAT), jnp.float32), eye_din], axis=1)  # (DIN, DOUT)
    w2_ext = jnp.concatenate([top, bot], axis=0)                                  # (DOUT, DOUT)
    b2_ext = jnp.concatenate([b2, jnp.zeros((DIN,), jnp.float32)])[None, :]       # (1, DOUT)
    w_slab = jnp.concatenate([w1_ext, b1_ext, w2_ext, b2_ext], axis=0)            # (ROWS, DOUT)
    assert w_slab.shape == (ROWS, DOUT)
    return w_slab


# ---------------- pure-JAX reference (mirrors Embedding.forward defaults) ----------------
def reference_forward(x, w1, b1, w2, b2):
    h = _gelu_exact(x @ w1 + b1)
    r = h @ w2 + b2
    return jnp.concatenate([r, x], axis=-1)


if __name__ == "__main__":
    key = jax.random.PRNGKey(0)
    kx, kp = jax.random.split(key)
    x = jax.random.normal(kx, (B, S, DIN), jnp.float32)
    w1, b1, w2, b2 = make_params(kp)
    w_slab = pack_params(w1, b1, w2, b2)

    out = embedding_forward(x, w_slab)
    out = jax.block_until_ready(out)

    ref = reference_forward(x, w1, b1, w2, b2)
    assert out.shape == (B, S, DOUT), out.shape
    assert jnp.allclose(out, ref, rtol=1e-4, atol=1e-4), float(jnp.max(jnp.abs(out - ref)))

    print("KERNEL_OK")
</pallas_src>

<mosaic_0001>
module attributes {stable_mosaic.version = 11 : i64} {
  func.func @embedding_kernel(%arg0: memref<16x3xf32, #tpu.memory_space<vmem>>, %arg1: memref<37x32xf32, #tpu.memory_space<vmem>>, %arg2: memref<16x32xf32, #tpu.memory_space<vmem>>) attributes {dimension_semantics = [], scalar_prefetch = 0 : i64, scratch_operands = 0 : i64, tpu.core_type = #tpu.core_type<tc>} {
    %c0 = arith.constant 0 : index
    %c0_0 = arith.constant 0 : index
    %0 = vector.load %arg0[%c0, %c0_0] : memref<16x3xf32, #tpu.memory_space<vmem>>, vector<16x3xf32>
    %c0_1 = arith.constant 0 : index
    %c0_2 = arith.constant 0 : index
    %1 = vector.load %arg1[%c0_1, %c0_2] : memref<37x32xf32, #tpu.memory_space<vmem>>, vector<3x32xf32>
    %c3 = arith.constant 3 : index
    %c0_3 = arith.constant 0 : index
    %2 = vector.load %arg1[%c3, %c0_3] : memref<37x32xf32, #tpu.memory_space<vmem>>, vector<1x32xf32>
    %c4 = arith.constant 4 : index
    %c0_4 = arith.constant 0 : index
    %3 = vector.load %arg1[%c4, %c0_4] : memref<37x32xf32, #tpu.memory_space<vmem>>, vector<32x32xf32>
    %c36 = arith.constant 36 : index
    %c0_5 = arith.constant 0 : index
    %4 = vector.load %arg1[%c36, %c0_5] : memref<37x32xf32, #tpu.memory_space<vmem>>, vector<1x32xf32>
    %cst = arith.constant dense<0.000000e+00> : vector<16x32xf32>
    %5 = tpu.matmul %0, %1, %cst {dimension_numbers = #tpu.dot_dimension_numbers<[1], [0], [0], [1], [0, 0, 1, 1], [], []>} : vector<16x3xf32>, vector<3x32xf32>, vector<16x32xf32> -> vector<16x32xf32>
    %6 = vector.broadcast %2 : vector<1x32xf32> to vector<16x32xf32>
    %7 = arith.addf %5, %6 : vector<16x32xf32>
    %8 = tpu.iota {dimensions = array<i32: 1>} : vector<16x32xi32>
    %c29_i32 = arith.constant 29 : i32
    %9 = vector.broadcast %c29_i32 : i32 to vector<16x32xi32>
    %10 = arith.cmpi slt, %8, %9 : vector<16x32xi32>
    %cst_6 = arith.constant 5.000000e-01 : f32
    %11 = vector.broadcast %cst_6 : f32 to vector<16x32xf32>
    %12 = arith.mulf %11, %7 : vector<16x32xf32>
    %cst_7 = arith.constant 0.707106769 : f32
    %13 = vector.broadcast %cst_7 : f32 to vector<16x32xf32>
    %14 = arith.mulf %7, %13 : vector<16x32xf32>
    %15 = math.erf %14 : vector<16x32xf32>
    %cst_8 = arith.constant 1.000000e+00 : f32
    %16 = vector.broadcast %cst_8 : f32 to vector<16x32xf32>
    %17 = arith.addf %16, %15 : vector<16x32xf32>
    %18 = arith.mulf %12, %17 : vector<16x32xf32>
    %19 = arith.select %10, %18, %7 : vector<16x32xi1>, vector<16x32xf32>
    %cst_9 = arith.constant dense<0.000000e+00> : vector<16x32xf32>
    %20 = tpu.matmul %19, %3, %cst_9 {dimension_numbers = #tpu.dot_dimension_numbers<[1], [0], [0], [1], [0, 0, 1, 1], [], []>} : vector<16x32xf32>, vector<32x32xf32>, vector<16x32xf32> -> vector<16x32xf32>
    %21 = vector.broadcast %4 : vector<1x32xf32> to vector<16x32xf32>
    %22 = arith.addf %20, %21 : vector<16x32xf32>
    %c0_10 = arith.constant 0 : index
    %c0_11 = arith.constant 0 : index
    %23 = vector.load %arg2[%c0_10, %c0_11] : memref<16x32xf32, #tpu.memory_space<vmem>>, vector<16x32xf32>
    tpu.vector_store %arg2[%c0_10, %c0_11], %22 {strides = array<i32>} : memref<16x32xf32, #tpu.memory_space<vmem>>, vector<16x32xf32>,
    return
  }
}

</mosaic_0001>

<llo_original>
// kernel: tpu_custom_call.1
$region0: #{tpu_custom_call.1}
  #allocation0 [shape = 'u32[]', space=smem, size = 0x4, offset = 0x4, fixed_abs, tag = 'smem constant byte address 0x4 - core index']
  #allocation1 [shape = 'u32[144,128]{1,0:T(1,128)}', space=vmem, size = 0x12000, scoped, tag = 'internal scratch']
  %s0 = inlined_call_operand.vmem [shape: f32[16,3], index: 0, kind: input, shape index: {}]
  %s1 = inlined_call_operand.vmem [shape: f32[37,32], index: 1, kind: input, shape index: {}]
  %s2 = inlined_call_operand.hbm [shape: f32[16,32], index: 2, kind: output, shape index: {}]
  %s3 = sld [smem:[#allocation0]]
  $region18: #{tpu_custom_call.1} parent=0
    _
  %s5 = ssub.s32 1, %s3
  %s6 = scalar_select 0, %s5, %s3
  $region1: #{tpu_custom_call.1} parent=0
    #allocation2 [shape = 'u8[8192]{0}', space=vmem, size = 0x2000, scoped, tag = 'output window, operand 0, single buffered']
    #allocation3 [shape = 's32[1]{0}', space=sflag, size = 0x4, scoped, tag = 'scoped memory for tpu_custom_call.1']
    %7 = vsyncpa [#allocation3], 0
    // Predicated region
    $region2: #{tpu_custom_call.1} parent=1 // pred_check
      _
    $region3: #{tpu_custom_call.1} parent=1 // pred_check_branch
      %9 = sbr.rel (0) target = $region5
    $region4: #{tpu_custom_call.1} parent=1 // pred_region
      _
    $region5: #{tpu_custom_call.1} parent=1 // pred_fallthru
      _
    // Predicated region
    $region6: #{tpu_custom_call.1} parent=1 // pred_check
      _
    $region7: #{tpu_custom_call.1} parent=1 // pred_check_branch
      %11 = sbr.rel (0) target = $region9
    $region8: #{tpu_custom_call.1} parent=1 // pred_region
      _
    $region9: #{tpu_custom_call.1} parent=1 // pred_fallthru
      _
    %v12 = vld [vmem:[%s0] sm:$0xff]
    %v13 = vld [vmem:[%s0 + $0x8] sm:$0xff]
    %v14 = vld [vmem:[%s1] sm:$0x7]
    %v15 = vld [vmem:[%s1 + $0x3] sm:$0x1]
    %v16 = vld [vmem:[%s1 + $0x4] sm:$0xff]
    %v17 = vld [vmem:[%s1 + $0xc] sm:$0xff]
    %v18 = vld [vmem:[%s1 + $0x14] sm:$0xff]
    %v19 = vld [vmem:[%s1 + $0x1c] sm:$0xff]
    %v20 = vld [vmem:[%s1 + $0x24] sm:$0x1]
    %v21 = vlaneseq
    %v22 = vshrl.u32 %v21, 7
    %v23 = vsub.s32 0, %v22
    %v24 = vrot.slane %v15, %v23
    %vm25 = vcmask 23552
    %v27 = vsel %vm25, %v12, 0
    %v30 = vsel %vm25, %v13, 0
    %vm32 = vcmask 1042432
    %v34 = vsel %vm32, %v14, 0
    %36 = vmatprep.subr.mxu0 0.0
    %37 = vmatpush1.msra.mxu0 %v34
    %38 = vmatprep.subr.mxu0 0.0
    %39 = vmatpush1.msra.mxu0 0.0
    %40 = vmatprep.subr.mxu0 0.0
    %41 = vmatpush1.msra.mxu0 0.0
    %42 = vmatprep.subr.mxu0 0.0
    %43 = vmatpush1.msra.mxu0 0.0
    %44 = vmatprep.subr.mxu0 0.0
    %45 = vmatpush1.msra.mxu0 0.0
    %46 = vmatprep.subr.mxu0 0.0
    %47 = vmatpush1.msra.mxu0 0.0
    %48 = vmatprep.subr.mxu0 0.0
    %49 = vmatpush1.msra.mxu0 0.0
    %50 = vmatprep.subr.mxu0 0.0
    %51 = vmatpush1.msra.mxu0 0.0
    %52 = vmatprep.subr.mxu0 0.0
    %53 = vmatpush1.msra.mxu0 0.0
    %54 = vmatprep.subr.mxu0 0.0
    %55 = vmatpush1.msra.mxu0 0.0
    %56 = vmatprep.subr.mxu0 0.0
    %57 = vmatpush1.msra.mxu0 0.0
    %58 = vmatprep.subr.mxu0 0.0
    %59 = vmatpush1.msra.mxu0 0.0
    %60 = vmatprep.subr.mxu0 0.0
    %61 = vmatpush1.msra.mxu0 0.0
    %62 = vmatprep.subr.mxu0 0.0
    %63 = vmatpush1.msra.mxu0 0.0
    %64 = vmatprep.subr.mxu0 0.0
    %65 = vmatpush1.msra.mxu0 0.0
    %66 = vmatprep.subr.mxu0 0.0
    %67 = vmatpush1.msra.mxu0 0.0
    %68 = vmatprep.subr.mxu0 0.0
    %69 = vmatpush1.msra.mxu0 0.0
    %70 = vmatprep.subr.mxu0 0.0
    %71 = vmatpush1.msra.mxu0 0.0
    %72 = vmatprep.subr.mxu0 0.0
    %73 = vmatpush1.msra.mxu0 0.0
    %74 = vmatprep.subr.mxu0 0.0
    %75 = vmatpush1.msra.mxu0 0.0
    %76 = vmatprep.subr.mxu0 0.0
    %77 = vmatpush1.msra.mxu0 0.0
    %78 = vmatprep.subr.mxu0 0.0
    %79 = vmatpush1.msra.mxu0 0.0
    %80 = vmatprep.subr.mxu0 0.0
    %81 = vmatpush1.msra.mxu0 0.0
    %82 = vmatprep.subr.mxu0 0.0
    %83 = vmatpush1.msra.mxu0 0.0
    %84 = vmatprep.subr.mxu0 0.0
    %85 = vmatpush1.msra.mxu0 0.0
    %86 = vmatprep.subr.mxu0 0.0
    %87 = vmatpush1.msra.mxu0 0.0
    %88 = vmatprep.subr.mxu0 0.0
    %89 = vmatpush1.msra.mxu0 0.0
    %90 = vmatprep.subr.mxu0 0.0
    %91 = vmatpush1.msra.mxu0 0.0
    %92 = vmatprep.subr.mxu0 0.0
    %93 = vmatpush1.msra.mxu0 0.0
    %94 = vmatprep.subr.mxu0 0.0
    %95 = vmatpush1.msra.mxu0 0.0
    %96 = vmatprep.subr.mxu0 0.0
    %97 = vmatpush1.msra.mxu0 0.0
    %98 = vmatprep.subr.mxu0 0.0
    %99 = vmatpush1.msra.mxu0 0.0
    %100 = vmatprep.mubr.f32.mxu0 0.0
    %101 = vmatmul.mubr.f32.gmra.mrb[0].mxu0 %v27
    %v102 = vpop.f32.mrb[0].mxu0
    %v103 = vadd.f32 %v24, %v102
    %v104 = vpop.f32.mrb[0].mxu0
    %105 = vmatprep.mubr.f32.mxu0 0.0
    %106 = vmatmul.mubr.f32.gmra.mrb[0].mxu0 %v30
    %v107 = vpop.f32.mrb[0].mxu0
    %v108 = vadd.f32 %v24, %v107
    %v109 = vpop.f32.mrb[0].mxu0
    %110 = vdwg.mxu0
    %v111 = vlaneseq
    %v112 = vand.u32 %v111, 127
    %vm113 = vcmp.lt.s32.totalorder %v112, 29
    %v114 = vmul.f32 %v103, 0.5
    %v115 = vmul.f32 %v108, 0.5
    %v116 = vmul.f32 %v103, 0.70710677
    %v117 = vmul.f32 %v108, 0.70710677
    %v118 = verf.f32.pop %v116
    %v119 = verf.f32.pop %v117
    %v120 = vadd.f32 %v118, 1.0
    %v121 = vadd.f32 %v119, 1.0
    %v122 = vmul.f32 %v114, %v120
    %v123 = vmul.f32 %v115, %v121
    %v124 = vsel %vm113, %v122, %v103
    %v125 = vsel %vm113, %v123, %v108
    %v126 = vlaneseq
    %v127 = vshrl.u32 %v126, 7
    %v128 = vsub.s32 0, %v127
    %v129 = vrot.slane %v20, %v128
    %vm130 = vcmask 261120
    %v132 = vsel %vm130, %v124, 0
    %v135 = vsel %vm130, %v125, 0
    %137 = vmatprep.subr.mxu0 0.0
    %138 = vmatpush1.msra.mxu0 %v16
    %139 = vmatprep.subr.mxu0 0.0
    %140 = vmatpush1.msra.mxu0 %v17
    %141 = vmatprep.subr.mxu0 0.0
    %142 = vmatpush1.msra.mxu0 %v18
    %143 = vmatprep.subr.mxu0 0.0
    %144 = vmatpush1.msra.mxu0 %v19
    %145 = vmatprep.subr.mxu0 0.0
    %146 = vmatpush1.msra.mxu0 0.0
    %147 = vmatprep.subr.mxu0 0.0
    %148 = vmatpush1.msra.mxu0 0.0
    %149 = vmatprep.subr.mxu0 0.0
    %150 = vmatpush1.msra.mxu0 0.0
    %151 = vmatprep.subr.mxu0 0.0
    %152 = vmatpush1.msra.mxu0 0.0
    %153 = vmatprep.subr.mxu0 0.0
    %154 = vmatpush1.msra.mxu0 0.0
    %155 = vmatprep.subr.mxu0 0.0
    %156 = vmatpush1.msra.mxu0 0.0
    %157 = vmatprep.subr.mxu0 0.0
    %158 = vmatpush1.msra.mxu0 0.0
    %159 = vmatprep.subr.mxu0 0.0
    %160 = vmatpush1.msra.mxu0 0.0
    %161 = vmatprep.subr.mxu0 0.0
    %162 = vmatpush1.msra.mxu0 0.0
    %163 = vmatprep.subr.mxu0 0.0
    %164 = vmatpush1.msra.mxu0 0.0
    %165 = vmatprep.subr.mxu0 0.0
    %166 = vmatpush1.msra.mxu0 0.0
    %167 = vmatprep.subr.mxu0 0.0
    %168 = vmatpush1.msra.mxu0 0.0
    %169 = vmatprep.subr.mxu0 0.0
    %170 = vmatpush1.msra.mxu0 0.0
    %171 = vmatprep.subr.mxu0 0.0
    %172 = vmatpush1.msra.mxu0 0.0
    %173 = vmatprep.subr.mxu0 0.0
    %174 = vmatpush1.msra.mxu0 0.0
    %175 = vmatprep.subr.mxu0 0.0
    %176 = vmatpush1.msra.mxu0 0.0
    %177 = vmatprep.subr.mxu0 0.0
    %178 = vmatpush1.msra.mxu0 0.0
    %179 = vmatprep.subr.mxu0 0.0
    %180 = vmatpush1.msra.mxu0 0.0
    %181 = vmatprep.subr.mxu0 0.0
    %182 = vmatpush1.msra.mxu0 0.0
    %183 = vmatprep.subr.mxu0 0.0
    %184 = vmatpush1.msra.mxu0 0.0
    %185 = vmatprep.subr.mxu0 0.0
    %186 = vmatpush1.msra.mxu0 0.0
    %187 = vmatprep.subr.mxu0 0.0
    %188 = vmatpush1.msra.mxu0 0.0
    %189 = vmatprep.subr.mxu0 0.0
    %190 = vmatpush1.msra.mxu0 0.0
    %191 = vmatprep.subr.mxu0 0.0
    %192 = vmatpush1.msra.mxu0 0.0
    %193 = vmatprep.subr.mxu0 0.0
    %194 = vmatpush1.msra.mxu0 0.0
    %195 = vmatprep.subr.mxu0 0.0
    %196 = vmatpush1.msra.mxu0 0.0
    %197 = vmatprep.subr.mxu0 0.0
    %198 = vmatpush1.msra.mxu0 0.0
    %199 = vmatprep.subr.mxu0 0.0
    %200 = vmatpush1.msra.mxu0 0.0
    %201 = vmatprep.mubr.f32.mxu0 0.0
    %202 = vmatmul.mubr.f32.gmra.mrb[0].mxu0 %v132
    %v203 = vpop.f32.mrb[0].mxu0
    %v204 = vadd.f32 %v129, %v203
    %v205 = vpop.f32.mrb[0].mxu0
    %206 = vmatprep.mubr.f32.mxu0 0.0
    %207 = vmatmul.mubr.f32.gmra.mrb[0].mxu0 %v135
    %v208 = vpop.f32.mrb[0].mxu0
    %v209 = vadd.f32 %v129, %v208
    %v210 = vpop.f32.mrb[0].mxu0
    %211 = vdwg.mxu0
    %212 = vst.msk [vmem:[#allocation2] sm:$0xff] %vm130, %v204
    %213 = vst.msk [vmem:[#allocation2 + $0x8] sm:$0xff] %vm130, %v209
    // Predicated region
    $region10: #{tpu_custom_call.1} parent=1 // pred_check
      _
    $region11: #{tpu_custom_call.1} parent=1 // pred_check_branch
      %215 = sbr.rel (0) target = $region13
    $region12: #{tpu_custom_call.1} parent=1 // pred_region
      %s217 = ssub.s32 256, 256
      %218 = vsyncadd [#allocation3], %s217
      %s219 = sshll.u32 [#allocation2], 4
      %s220 = int_to_ptr.vmem [resolvable:$true] %s219
      %225 = dma.vmem_to_hbm [thread:$0]  %s220, 256, %s2, [#allocation3], 128, 128, 8
    $region13: #{tpu_custom_call.1} parent=1 // pred_fallthru
      _
    // Predicated region
    $region14: #{tpu_custom_call.1} parent=1 // pred_check
      _
    $region15: #{tpu_custom_call.1} parent=1 // pred_check_branch
      %227 = sbr.rel (0) target = $region17
    $region16: #{tpu_custom_call.1} parent=1 // pred_region
      %228 = dma.done [#allocation3], 256
    $region17: #{tpu_custom_call.1} parent=1 // pred_fallthru
      _
    %229 = vsyncpa [#allocation3], 1

</llo_original>
